<compile_context>
chip_gen: v6e
topology: v6e:2x2x1
jax: 0.10.0
libtpu: 0.0.40
codegen_flags: <defaults>
</compile_context>

<pallas_src>
import jax
import jax.numpy as jnp
from jax.experimental import pallas as pl
from jax.experimental.pallas import tpu as pltpu


# ----------------------------------------------------------------------------
# Fused multi-step decoder kernel
#   grid = (T,): one decode step per grid iteration, weights resident in VMEM,
#   recurrent state carried in VMEM scratch across steps.
# ----------------------------------------------------------------------------
def _make_decoder_kernel(num_layers, hidden_size, dmax, batch):
    L, H, B = num_layers, hidden_size, batch

    def kernel(tok_ref,                       # SMEM, (T*B,) int32 (scalar prefetch)
               init_ref,                      # (B, 2*L*H) f32  packed initial (h, c)
               emb_ref,                       # (V, E) f32
               w_ref,                         # (L, dmax+H, 4H) bf16 (fused, g-cols x2)
               b_ref,                         # (L, 1, 4H) f32       (b_ih+b_hh, g x2)
               fcw_ref,                       # (H, O) bf16 (pre-transposed)
               fcb_ref,                       # (1, O) f32
               logits_ref,                    # out block (1, B, O) f32
               state_out_ref,                 # out (B, 2*L*H) f32, written on last step
               state_sc):                     # VMEM scratch (B, 2*L*H) f32, persists
        t = pl.program_id(0)

        @pl.when(t == 0)
        def _init():
            state_sc[...] = init_ref[...]

        E = emb_ref.shape[1]

        # --- Embedding gather: B dynamic row slices driven by SMEM token ids. ---
        # TODO(synk): nn.Dropout / inter-layer LSTM dropout are identity in eval mode;
        #             stochastic dropout masks are not implemented.
        rows = []
        for b in range(B):
            tok = tok_ref[t * B + b]
            rows.append(emb_ref[pl.ds(tok, 1), :])          # (1, E) f32
        layer_in = jnp.concatenate(rows, axis=0)            # (B, E) f32

        # --- Unrolled LSTM layer stack (one time step). ---
        for l in range(L):
            h_prev = state_sc[:, l * H:(l + 1) * H]                  # (B, H) f32
            c_prev = state_sc[:, (L + l) * H:(L + l + 1) * H]        # (B, H) f32

            in_dim = layer_in.shape[-1]
            x_l = layer_in
            if in_dim < dmax:  # static pad so all layers share one packed weight shape
                x_l = jnp.concatenate(
                    [layer_in, jnp.zeros((B, dmax - in_dim), layer_in.dtype)], axis=-1)

            # Single fused gate matmul: [x ; h] @ W_comb, f32 accumulation on the MXU.
            xh = jnp.concatenate([x_l, h_prev], axis=-1).astype(jnp.bfloat16)
            gates = (jnp.dot(xh, w_ref[l], preferred_element_type=jnp.float32)
                     + b_ref[l])                                     # (B, 4H) f32

            # ONE sigmoid over the whole (B, 4H) gates vreg; g recovered via
            # tanh(z) = 2*sigmoid(2z) - 1 (the x2 was folded into W/b at init).
            sig = jax.nn.sigmoid(gates)
            i_g = sig[:, 0 * H:1 * H]
            f_g = sig[:, 1 * H:2 * H]
            g_g = 2.0 * sig[:, 2 * H:3 * H] - 1.0
            o_g = sig[:, 3 * H:4 * H]

            c_new = f_g * c_prev + i_g * g_g
            h_new = o_g * jnp.tanh(c_new)

            state_sc[:, l * H:(l + 1) * H] = h_new
            state_sc[:, (L + l) * H:(L + l + 1) * H] = c_new
            layer_in = h_new

        # --- Final Linear projection; logits streamed out per time step. ---
        logits_ref[0] = (jnp.dot(layer_in.astype(jnp.bfloat16), fcw_ref[...],
                                 preferred_element_type=jnp.float32)
                         + fcb_ref[...])

        @pl.when(t == pl.num_programs(0) - 1)
        def _finalize():
            state_out_ref[...] = state_sc[...]

    return kernel


# ----------------------------------------------------------------------------
# Wrappers
# ----------------------------------------------------------------------------
@jax.jit
def decoder_decode_steps(params, tokens, hidden_state, cell_state):
    """Fused T-step teacher-forced decode.

    tokens:       (T, B) int32
    hidden_state: (L, B, H) f32
    cell_state:   (L, B, H) f32
    returns: logits (T, B, O), (h_out (L,B,H), c_out (L,B,H))
    """
    T, B = tokens.shape
    L, _, H = hidden_state.shape
    O = params["fc_w"].shape[1]
    dmax = params["w_all"].shape[1] - H

    # Lane-dense packed state: (B, 2*L*H) — one f32 vreg row per batch element.
    hc0 = jnp.concatenate(
        [jnp.transpose(hidden_state, (1, 0, 2)).reshape(B, L * H),
         jnp.transpose(cell_state, (1, 0, 2)).reshape(B, L * H)], axis=-1)

    tok_flat = tokens.reshape(T * B).astype(jnp.int32)

    grid_spec = pltpu.PrefetchScalarGridSpec(
        num_scalar_prefetch=1,
        grid=(T,),
        in_specs=[
            pl.BlockSpec(hc0.shape, lambda t, tok: (0, 0)),
            pl.BlockSpec(params["embedding"].shape, lambda t, tok: (0, 0)),
            pl.BlockSpec(params["w_all"].shape, lambda t, tok: (0, 0, 0)),
            pl.BlockSpec(params["b_all"].shape, lambda t, tok: (0, 0, 0)),
            pl.BlockSpec(params["fc_w"].shape, lambda t, tok: (0, 0)),
            pl.BlockSpec(params["fc_b"].shape, lambda t, tok: (0, 0)),
        ],
        out_specs=[
            pl.BlockSpec((1, B, O), lambda t, tok: (t, 0, 0)),       # streamed logits
            pl.BlockSpec((B, 2 * L * H), lambda t, tok: (0, 0)),     # final packed state
        ],
        scratch_shapes=[pltpu.VMEM((B, 2 * L * H), jnp.float32)],
    )

    logits, state_out = pl.pallas_call(
        _make_decoder_kernel(L, H, dmax, B),
        out_shape=(
            jax.ShapeDtypeStruct((T, B, O), jnp.float32),
            jax.ShapeDtypeStruct((B, 2 * L * H), jnp.float32),
        ),
        grid_spec=grid_spec,
        compiler_params=pltpu.CompilerParams(
            dimension_semantics=("arbitrary",)),   # sequential recurrence over time
    )(tok_flat, hc0, params["embedding"], params["w_all"], params["b_all"],
      params["fc_w"], params["fc_b"])

    h_out = state_out[:, :L * H].reshape(B, L, H).transpose(1, 0, 2)
    c_out = state_out[:, L * H:].reshape(B, L, H).transpose(1, 0, 2)
    return logits, (h_out, c_out)


def decoder_forward(params, x_tokens, hidden_state, cell_state):
    """Single decode step — exact semantics of Decoder.forward (inference)."""
    logits, (h, c) = decoder_decode_steps(params, x_tokens[None, :], hidden_state, cell_state)
    return logits[0], (h, c)


# ----------------------------------------------------------------------------
# Parameter construction (PyTorch-style init, then pre-transposed / fused / packed)
# ----------------------------------------------------------------------------
def init_params(key, input_size, embedding_size, hidden_size, output_size,
                num_layers, weight_dtype=jnp.bfloat16):
    H = hidden_size
    dmax = max(embedding_size, hidden_size)
    k = 1.0 / float(hidden_size) ** 0.5
    keys = jax.random.split(key, 3 + 4 * num_layers)
    ki = iter(keys)

    params = {}
    # nn.Embedding default init: N(0, 1); kept f32 (small table, exact row gather).
    params["embedding"] = jax.random.normal(
        next(ki), (input_size, embedding_size), jnp.float32)

    w_all, b_all = [], []
    for l in range(num_layers):
        in_dim = embedding_size if l == 0 else hidden_size
        w_ih = jax.random.uniform(next(ki), (4 * H, in_dim), jnp.float32, -k, k)
        w_hh = jax.random.uniform(next(ki), (4 * H, H), jnp.float32, -k, k)
        b_ih = jax.random.uniform(next(ki), (4 * H,), jnp.float32, -k, k)
        b_hh = jax.random.uniform(next(ki), (4 * H,), jnp.float32, -k, k)
        # Pre-transposed + fused [x; h] weight, zero-padded to a common (dmax+H, 4H) shape.
        w = jnp.zeros((dmax + H, 4 * H), jnp.float32)
        w = w.at[:in_dim].set(w_ih.T)
        w = w.at[dmax:].set(w_hh.T)
        b = (b_ih + b_hh).reshape(1, 4 * H)
        # Fold x2 into the g-gate (PyTorch order i,f,g,o -> columns [2H:3H]) so the kernel
        # needs only one sigmoid pass over the gates vreg (tanh(z) = 2*sigmoid(2z) - 1).
        scale = jnp.ones((1, 4 * H), jnp.float32).at[:, 2 * H:3 * H].set(2.0)
        w_all.append(w * scale)
        b_all.append(b * scale)
    params["w_all"] = jnp.stack(w_all).astype(weight_dtype)   # (L, dmax+H, 4H) bf16
    params["b_all"] = jnp.stack(b_all)                        # (L, 1, 4H) f32

    # nn.Linear: uniform(-1/sqrt(fan_in), 1/sqrt(fan_in)); weight pre-transposed, bf16.
    params["fc_w"] = jax.random.uniform(
        next(ki), (output_size, hidden_size), jnp.float32, -k, k).T.astype(weight_dtype)
    params["fc_b"] = jax.random.uniform(
        next(ki), (output_size,), jnp.float32, -k, k).reshape(1, output_size)
    return params


# ----------------------------------------------------------------------------
# Precision-matched pure-JAX reference (for correctness check)
# ----------------------------------------------------------------------------
def reference_step(params, x_tokens, h, c):
    L, _, H = h.shape
    dmax = params["w_all"].shape[1] - H
    layer_in = params["embedding"][x_tokens]                 # (B, E) f32
    new_h, new_c = [], []
    for l in range(L):
        W = params["w_all"][l].astype(jnp.float32)           # folded x2 on g columns
        b = params["b_all"][l]
        in_dim = layer_in.shape[-1]
        x_l = layer_in if in_dim == dmax else jnp.pad(
            layer_in, ((0, 0), (0, dmax - in_dim)))
        xh = jnp.concatenate([x_l, h[l]], axis=-1).astype(jnp.bfloat16).astype(jnp.float32)
        gates = xh @ W + b
        i_g = jax.nn.sigmoid(gates[:, 0 * H:1 * H])
        f_g = jax.nn.sigmoid(gates[:, 1 * H:2 * H])
        g_g = jnp.tanh(gates[:, 2 * H:3 * H] * 0.5)          # undo the folded x2 exactly
        o_g = jax.nn.sigmoid(gates[:, 3 * H:4 * H])
        c_new = f_g * c[l] + i_g * g_g
        h_new = o_g * jnp.tanh(c_new)
        new_h.append(h_new)
        new_c.append(c_new)
        layer_in = h_new
    logits = (layer_in.astype(jnp.bfloat16).astype(jnp.float32)
              @ params["fc_w"].astype(jnp.float32) + params["fc_b"])
    return logits, jnp.stack(new_h), jnp.stack(new_c)


def reference_decode(params, tokens, h, c):
    logits_all = []
    for t in range(tokens.shape[0]):
        logits, h, c = reference_step(params, tokens[t], h, c)
        logits_all.append(logits)
    return jnp.stack(logits_all), h, c


# ----------------------------------------------------------------------------
if __name__ == "__main__":
    input_size = 64       # target vocab size
    embedding_size = 32
    hidden_size = 32      # 4H = 128 -> one full f32 vreg of gates
    output_size = 64
    num_layers = 2
    batch = 8
    steps = 8

    key = jax.random.PRNGKey(0)
    k_params, k_tok, k_h, k_c = jax.random.split(key, 4)

    params = init_params(
        k_params, input_size, embedding_size, hidden_size, output_size, num_layers)

    tokens = jax.random.randint(k_tok, (steps, batch), 0, input_size, jnp.int32)
    hidden_state = jax.random.normal(k_h, (num_layers, batch, hidden_size), jnp.float32)
    cell_state = jax.random.normal(k_c, (num_layers, batch, hidden_size), jnp.float32)

    # --- single step: original Decoder.forward semantics ---
    preds, (h1, c1) = decoder_forward(params, tokens[0], hidden_state, cell_state)
    jax.block_until_ready((preds, h1, c1))
    assert preds.shape == (batch, output_size)
    assert h1.shape == (num_layers, batch, hidden_size)
    assert c1.shape == (num_layers, batch, hidden_size)

    p_ref, h_ref, c_ref = reference_step(params, tokens[0], hidden_state, cell_state)
    assert jnp.allclose(preds, p_ref, atol=2e-2, rtol=2e-2)
    assert jnp.allclose(h1, h_ref, atol=2e-2, rtol=2e-2)
    assert jnp.allclose(c1, c_ref, atol=2e-2, rtol=2e-2)

    # --- fused T-step decode (weights resident, state carried in VMEM) ---
    logits, (hT, cT) = decoder_decode_steps(params, tokens, hidden_state, cell_state)
    jax.block_until_ready((logits, hT, cT))
    assert logits.shape == (steps, batch, output_size)

    l_ref, hT_ref, cT_ref = reference_decode(params, tokens, hidden_state, cell_state)
    assert jnp.allclose(logits, l_ref, atol=3e-2, rtol=3e-2)
    assert jnp.allclose(hT, hT_ref, atol=3e-2, rtol=3e-2)
    assert jnp.allclose(cT, cT_ref, atol=3e-2, rtol=3e-2)

    print("KERNEL_OK")
</pallas_src>

<mosaic_0001>
module attributes {stable_mosaic.version = 11 : i64} {
  func.func @kernel(%arg0: i32, %arg1: memref<8xi32, #tpu.memory_space<smem>>, %arg2: memref<8x128xf32, #tpu.memory_space<vmem>>, %arg3: memref<64x32xf32, #tpu.memory_space<vmem>>, %arg4: memref<2x64x128xbf16, #tpu.memory_space<vmem>>, %arg5: memref<2x1x128xf32, #tpu.memory_space<vmem>>, %arg6: memref<32x64xbf16, #tpu.memory_space<vmem>>, %arg7: memref<1x64xf32, #tpu.memory_space<vmem>>, %arg8: memref<1x8x64xf32, #tpu.memory_space<vmem>>, %arg9: memref<8x128xf32, #tpu.memory_space<vmem>>, %arg10: memref<8x128xf32, #tpu.memory_space<vmem>>) attributes {dimension_semantics = [#tpu.dimension_semantics<arbitrary>], iteration_bounds = array<i64: 1>, scalar_prefetch = 1 : i64, scratch_operands = 1 : i64, tpu.core_type = #tpu.core_type<tc>, window_params = [{pipeline_mode = #tpu.pipeline_mode<synchronous>, transform_indices = @transform_0, window_bounds = array<i64: 8, 128>}, {pipeline_mode = #tpu.pipeline_mode<synchronous>, transform_indices = @transform_1, window_bounds = array<i64: 64, 32>}, {pipeline_mode = #tpu.pipeline_mode<synchronous>, transform_indices = @transform_2, window_bounds = array<i64: 2, 64, 128>}, {pipeline_mode = #tpu.pipeline_mode<synchronous>, transform_indices = @transform_3, window_bounds = array<i64: 2, 1, 128>}, {pipeline_mode = #tpu.pipeline_mode<synchronous>, transform_indices = @transform_4, window_bounds = array<i64: 32, 64>}, {pipeline_mode = #tpu.pipeline_mode<synchronous>, transform_indices = @transform_5, window_bounds = array<i64: 1, 64>}, {transform_indices = @transform_6, window_bounds = array<i64: 1, 8, 64>}, {pipeline_mode = #tpu.pipeline_mode<synchronous>, transform_indices = @transform_7, window_bounds = array<i64: 8, 128>}]} {
    %c0_i32 = arith.constant 0 : i32
    %0 = arith.cmpi eq, %arg0, %c0_i32 : i32
    %1 = arith.extui %0 : i1 to i32
    %c0_i32_0 = arith.constant 0 : i32
    %2 = arith.cmpi ne, %1, %c0_i32_0 : i32
    scf.if %2 {
      %c0_57 = arith.constant 0 : index
      %c0_58 = arith.constant 0 : index
      %126 = vector.load %arg2[%c0_57, %c0_58] : memref<8x128xf32, #tpu.memory_space<vmem>>, vector<8x128xf32>
      %c0_59 = arith.constant 0 : index
      %c0_60 = arith.constant 0 : index
      %127 = vector.load %arg10[%c0_59, %c0_60] : memref<8x128xf32, #tpu.memory_space<vmem>>, vector<8x128xf32>
      tpu.vector_store %arg10[%c0_59, %c0_60], %126 {strides = array<i32>} : memref<8x128xf32, #tpu.memory_space<vmem>>, vector<8x128xf32>,
    } else {
    }
    %c8_i32 = arith.constant 8 : i32
    %3 = arith.muli %arg0, %c8_i32 : i32
    %c0_i32_1 = arith.constant 0 : i32
    %4 = arith.addi %3, %c0_i32_1 : i32
    %5 = arith.index_cast %4 : i32 to index
    %6 = memref.load %arg1[%5] : memref<8xi32, #tpu.memory_space<smem>>
    %7 = arith.index_cast %6 : i32 to index
    %c0 = arith.constant 0 : index
    %8 = vector.load %arg3[%7, %c0] : memref<64x32xf32, #tpu.memory_space<vmem>>, vector<1x32xf32>
    %c8_i32_2 = arith.constant 8 : i32
    %9 = arith.muli %arg0, %c8_i32_2 : i32
    %c1_i32 = arith.constant 1 : i32
    %10 = arith.addi %9, %c1_i32 : i32
    %11 = arith.index_cast %10 : i32 to index
    %12 = memref.load %arg1[%11] : memref<8xi32, #tpu.memory_space<smem>>
    %13 = arith.index_cast %12 : i32 to index
    %c0_3 = arith.constant 0 : index
    %14 = vector.load %arg3[%13, %c0_3] : memref<64x32xf32, #tpu.memory_space<vmem>>, vector<1x32xf32>
    %c8_i32_4 = arith.constant 8 : i32
    %15 = arith.muli %arg0, %c8_i32_4 : i32
    %c2_i32 = arith.constant 2 : i32
    %16 = arith.addi %15, %c2_i32 : i32
    %17 = arith.index_cast %16 : i32 to index
    %18 = memref.load %arg1[%17] : memref<8xi32, #tpu.memory_space<smem>>
    %19 = arith.index_cast %18 : i32 to index
    %c0_5 = arith.constant 0 : index
    %20 = vector.load %arg3[%19, %c0_5] : memref<64x32xf32, #tpu.memory_space<vmem>>, vector<1x32xf32>
    %c8_i32_6 = arith.constant 8 : i32
    %21 = arith.muli %arg0, %c8_i32_6 : i32
    %c3_i32 = arith.constant 3 : i32
    %22 = arith.addi %21, %c3_i32 : i32
    %23 = arith.index_cast %22 : i32 to index
    %24 = memref.load %arg1[%23] : memref<8xi32, #tpu.memory_space<smem>>
    %25 = arith.index_cast %24 : i32 to index
    %c0_7 = arith.constant 0 : index
    %26 = vector.load %arg3[%25, %c0_7] : memref<64x32xf32, #tpu.memory_space<vmem>>, vector<1x32xf32>
    %c8_i32_8 = arith.constant 8 : i32
    %27 = arith.muli %arg0, %c8_i32_8 : i32
    %c4_i32 = arith.constant 4 : i32
    %28 = arith.addi %27, %c4_i32 : i32
    %29 = arith.index_cast %28 : i32 to index
    %30 = memref.load %arg1[%29] : memref<8xi32, #tpu.memory_space<smem>>
    %31 = arith.index_cast %30 : i32 to index
    %c0_9 = arith.constant 0 : index
    %32 = vector.load %arg3[%31, %c0_9] : memref<64x32xf32, #tpu.memory_space<vmem>>, vector<1x32xf32>
    %c8_i32_10 = arith.constant 8 : i32
    %33 = arith.muli %arg0, %c8_i32_10 : i32
    %c5_i32 = arith.constant 5 : i32
    %34 = arith.addi %33, %c5_i32 : i32
    %35 = arith.index_cast %34 : i32 to index
    %36 = memref.load %arg1[%35] : memref<8xi32, #tpu.memory_space<smem>>
    %37 = arith.index_cast %36 : i32 to index
    %c0_11 = arith.constant 0 : index
    %38 = vector.load %arg3[%37, %c0_11] : memref<64x32xf32, #tpu.memory_space<vmem>>, vector<1x32xf32>
    %c8_i32_12 = arith.constant 8 : i32
    %39 = arith.muli %arg0, %c8_i32_12 : i32
    %c6_i32 = arith.constant 6 : i32
    %40 = arith.addi %39, %c6_i32 : i32
    %41 = arith.index_cast %40 : i32 to index
    %42 = memref.load %arg1[%41] : memref<8xi32, #tpu.memory_space<smem>>
    %43 = arith.index_cast %42 : i32 to index
    %c0_13 = arith.constant 0 : index
    %44 = vector.load %arg3[%43, %c0_13] : memref<64x32xf32, #tpu.memory_space<vmem>>, vector<1x32xf32>
    %c8_i32_14 = arith.constant 8 : i32
    %45 = arith.muli %arg0, %c8_i32_14 : i32
    %c7_i32 = arith.constant 7 : i32
    %46 = arith.addi %45, %c7_i32 : i32
    %47 = arith.index_cast %46 : i32 to index
    %48 = memref.load %arg1[%47] : memref<8xi32, #tpu.memory_space<smem>>
    %49 = arith.index_cast %48 : i32 to index
    %c0_15 = arith.constant 0 : index
    %50 = vector.load %arg3[%49, %c0_15] : memref<64x32xf32, #tpu.memory_space<vmem>>, vector<1x32xf32>
    %51 = tpu.concatenate %8, %14, %20, %26, %32, %38, %44, %50 in 0 : vector<1x32xf32>, vector<1x32xf32>, vector<1x32xf32>, vector<1x32xf32>, vector<1x32xf32>, vector<1x32xf32>, vector<1x32xf32>, vector<1x32xf32> -> vector<8x32xf32>
    %c0_16 = arith.constant 0 : index
    %c0_17 = arith.constant 0 : index
    %52 = vector.load %arg10[%c0_16, %c0_17] : memref<8x128xf32, #tpu.memory_space<vmem>>, vector<8x32xf32>
    %c0_18 = arith.constant 0 : index
    %c64 = arith.constant 64 : index
    %53 = vector.load %arg10[%c0_18, %c64] : memref<8x128xf32, #tpu.memory_space<vmem>>, vector<8x32xf32>
    %54 = tpu.concatenate %51, %52 in 1 : vector<8x32xf32>, vector<8x32xf32> -> vector<8x64xf32>
    %55 = arith.truncf %54 : vector<8x64xf32> to vector<8x64xbf16>
    %c0_19 = arith.constant 0 : index
    %c0_20 = arith.constant 0 : index
    %c0_21 = arith.constant 0 : index
    %56 = vector.load %arg4[%c0_19, %c0_20, %c0_21] : memref<2x64x128xbf16, #tpu.memory_space<vmem>>, vector<1x64x128xbf16>
    %57 = vector.shape_cast %56 : vector<1x64x128xbf16> to vector<64x128xbf16>
    %cst = arith.constant dense<0.000000e+00> : vector<8x128xf32>
    %58 = tpu.matmul %55, %57, %cst {dimension_numbers = #tpu.dot_dimension_numbers<[1], [0], [0], [1], [0, 0, 1, 1], [], []>} : vector<8x64xbf16>, vector<64x128xbf16>, vector<8x128xf32> -> vector<8x128xf32>
    %c0_22 = arith.constant 0 : index
    %c0_23 = arith.constant 0 : index
    %c0_24 = arith.constant 0 : index
    %59 = vector.load %arg5[%c0_22, %c0_23, %c0_24] : memref<2x1x128xf32, #tpu.memory_space<vmem>>, vector<1x1x128xf32>
    %60 = vector.shape_cast %59 : vector<1x1x128xf32> to vector<1x128xf32>
    %61 = vector.broadcast %60 : vector<1x128xf32> to vector<8x128xf32>
    %62 = arith.addf %58, %61 : vector<8x128xf32>
    %63 = arith.negf %62 : vector<8x128xf32>
    %64 = math.exp %63 : vector<8x128xf32>
    %cst_25 = arith.constant 1.000000e+00 : f32
    %65 = vector.broadcast %cst_25 : f32 to vector<8x128xf32>
    %66 = arith.addf %65, %64 : vector<8x128xf32>
    %67 = arith.divf %65, %66 : vector<8x128xf32>
    %68 = vector.extract_strided_slice %67 {offsets = [0, 0], sizes = [8, 32], strides = [1, 1]} : vector<8x128xf32> to vector<8x32xf32>
    %69 = vector.extract_strided_slice %67 {offsets = [0, 32], sizes = [8, 32], strides = [1, 1]} : vector<8x128xf32> to vector<8x32xf32>
    %70 = vector.extract_strided_slice %67 {offsets = [0, 64], sizes = [8, 32], strides = [1, 1]} : vector<8x128xf32> to vector<8x32xf32>
    %cst_26 = arith.constant 2.000000e+00 : f32
    %71 = vector.broadcast %cst_26 : f32 to vector<8x32xf32>
    %72 = arith.mulf %71, %70 : vector<8x32xf32>
    %cst_27 = arith.constant 1.000000e+00 : f32
    %73 = vector.broadcast %cst_27 : f32 to vector<8x32xf32>
    %74 = arith.subf %72, %73 : vector<8x32xf32>
    %75 = vector.extract_strided_slice %67 {offsets = [0, 96], sizes = [8, 32], strides = [1, 1]} : vector<8x128xf32> to vector<8x32xf32>
    %76 = arith.mulf %69, %53 : vector<8x32xf32>
    %77 = arith.mulf %68, %74 : vector<8x32xf32>
    %78 = arith.addf %76, %77 : vector<8x32xf32>
    %79 = math.tanh %78 : vector<8x32xf32>
    %80 = arith.mulf %75, %79 : vector<8x32xf32>
    %c0_28 = arith.constant 0 : index
    %c0_29 = arith.constant 0 : index
    %81 = vector.load %arg10[%c0_28, %c0_29] : memref<8x128xf32, #tpu.memory_space<vmem>>, vector<8x32xf32>
    tpu.vector_store %arg10[%c0_28, %c0_29], %80 {strides = array<i32>} : memref<8x128xf32, #tpu.memory_space<vmem>>, vector<8x32xf32>,
    %c0_30 = arith.constant 0 : index
    %c64_31 = arith.constant 64 : index
    %82 = vector.load %arg10[%c0_30, %c64_31] : memref<8x128xf32, #tpu.memory_space<vmem>>, vector<8x32xf32>
    tpu.vector_store %arg10[%c0_30, %c64_31], %78 {strides = array<i32>} : memref<8x128xf32, #tpu.memory_space<vmem>>, vector<8x32xf32>,
    %c0_32 = arith.constant 0 : index
    %c32 = arith.constant 32 : index
    %83 = vector.load %arg10[%c0_32, %c32] : memref<8x128xf32, #tpu.memory_space<vmem>>, vector<8x32xf32>
    %c0_33 = arith.constant 0 : index
    %c96 = arith.constant 96 : index
    %84 = vector.load %arg10[%c0_33, %c96] : memref<8x128xf32, #tpu.memory_space<vmem>>, vector<8x32xf32>
    %85 = tpu.concatenate %80, %83 in 1 : vector<8x32xf32>, vector<8x32xf32> -> vector<8x64xf32>
    %86 = arith.truncf %85 : vector<8x64xf32> to vector<8x64xbf16>
    %c1 = arith.constant 1 : index
    %c0_34 = arith.constant 0 : index
    %c0_35 = arith.constant 0 : index
    %87 = vector.load %arg4[%c1, %c0_34, %c0_35] : memref<2x64x128xbf16, #tpu.memory_space<vmem>>, vector<1x64x128xbf16>
    %88 = vector.shape_cast %87 : vector<1x64x128xbf16> to vector<64x128xbf16>
    %cst_36 = arith.constant dense<0.000000e+00> : vector<8x128xf32>
    %89 = tpu.matmul %86, %88, %cst_36 {dimension_numbers = #tpu.dot_dimension_numbers<[1], [0], [0], [1], [0, 0, 1, 1], [], []>} : vector<8x64xbf16>, vector<64x128xbf16>, vector<8x128xf32> -> vector<8x128xf32>
    %c1_37 = arith.constant 1 : index
    %c0_38 = arith.constant 0 : index
    %c0_39 = arith.constant 0 : index
    %90 = vector.load %arg5[%c1_37, %c0_38, %c0_39] : memref<2x1x128xf32, #tpu.memory_space<vmem>>, vector<1x1x128xf32>
    %91 = vector.shape_cast %90 : vector<1x1x128xf32> to vector<1x128xf32>
    %92 = vector.broadcast %91 : vector<1x128xf32> to vector<8x128xf32>
    %93 = arith.addf %89, %92 : vector<8x128xf32>
    %94 = arith.negf %93 : vector<8x128xf32>
    %95 = math.exp %94 : vector<8x128xf32>
    %cst_40 = arith.constant 1.000000e+00 : f32
    %96 = vector.broadcast %cst_40 : f32 to vector<8x128xf32>
    %97 = arith.addf %96, %95 : vector<8x128xf32>
    %98 = arith.divf %96, %97 : vector<8x128xf32>
    %99 = vector.extract_strided_slice %98 {offsets = [0, 0], sizes = [8, 32], strides = [1, 1]} : vector<8x128xf32> to vector<8x32xf32>
    %100 = vector.extract_strided_slice %98 {offsets = [0, 32], sizes = [8, 32], strides = [1, 1]} : vector<8x128xf32> to vector<8x32xf32>
    %101 = vector.extract_strided_slice %98 {offsets = [0, 64], sizes = [8, 32], strides = [1, 1]} : vector<8x128xf32> to vector<8x32xf32>
    %cst_41 = arith.constant 2.000000e+00 : f32
    %102 = vector.broadcast %cst_41 : f32 to vector<8x32xf32>
    %103 = arith.mulf %102, %101 : vector<8x32xf32>
    %cst_42 = arith.constant 1.000000e+00 : f32
    %104 = vector.broadcast %cst_42 : f32 to vector<8x32xf32>
    %105 = arith.subf %103, %104 : vector<8x32xf32>
    %106 = vector.extract_strided_slice %98 {offsets = [0, 96], sizes = [8, 32], strides = [1, 1]} : vector<8x128xf32> to vector<8x32xf32>
    %107 = arith.mulf %100, %84 : vector<8x32xf32>
    %108 = arith.mulf %99, %105 : vector<8x32xf32>
    %109 = arith.addf %107, %108 : vector<8x32xf32>
    %110 = math.tanh %109 : vector<8x32xf32>
    %111 = arith.mulf %106, %110 : vector<8x32xf32>
    %c0_43 = arith.constant 0 : index
    %c32_44 = arith.constant 32 : index
    %112 = vector.load %arg10[%c0_43, %c32_44] : memref<8x128xf32, #tpu.memory_space<vmem>>, vector<8x32xf32>
    tpu.vector_store %arg10[%c0_43, %c32_44], %111 {strides = array<i32>} : memref<8x128xf32, #tpu.memory_space<vmem>>, vector<8x32xf32>,
    %c0_45 = arith.constant 0 : index
    %c96_46 = arith.constant 96 : index
    %113 = vector.load %arg10[%c0_45, %c96_46] : memref<8x128xf32, #tpu.memory_space<vmem>>, vector<8x32xf32>
    tpu.vector_store %arg10[%c0_45, %c96_46], %109 {strides = array<i32>} : memref<8x128xf32, #tpu.memory_space<vmem>>, vector<8x32xf32>,
    %114 = arith.truncf %111 : vector<8x32xf32> to vector<8x32xbf16>
    %c0_47 = arith.constant 0 : index
    %c0_48 = arith.constant 0 : index
    %115 = vector.load %arg6[%c0_47, %c0_48] : memref<32x64xbf16, #tpu.memory_space<vmem>>, vector<32x64xbf16>
    %cst_49 = arith.constant dense<0.000000e+00> : vector<8x64xf32>
    %116 = tpu.matmul %114, %115, %cst_49 {dimension_numbers = #tpu.dot_dimension_numbers<[1], [0], [0], [1], [0, 0, 1, 1], [], []>} : vector<8x32xbf16>, vector<32x64xbf16>, vector<8x64xf32> -> vector<8x64xf32>
    %c0_50 = arith.constant 0 : index
    %c0_51 = arith.constant 0 : index
    %117 = vector.load %arg7[%c0_50, %c0_51] : memref<1x64xf32, #tpu.memory_space<vmem>>, vector<1x64xf32>
    %118 = vector.broadcast %117 : vector<1x64xf32> to vector<8x64xf32>
    %119 = arith.addf %116, %118 : vector<8x64xf32>
    %c0_52 = arith.constant 0 : index
    %c0_53 = arith.constant 0 : index
    %c0_54 = arith.constant 0 : index
    %120 = vector.load %arg8[%c0_52, %c0_53, %c0_54] : memref<1x8x64xf32, #tpu.memory_space<vmem>>, vector<1x8x64xf32>
    %121 = vector.shape_cast %120 : vector<1x8x64xf32> to vector<8x64xf32>
    %122 = vector.shape_cast %119 : vector<8x64xf32> to vector<1x8x64xf32>
    tpu.vector_store %arg8[%c0_52, %c0_53, %c0_54], %122 {strides = array<i32>} : memref<1x8x64xf32, #tpu.memory_space<vmem>>, vector<1x8x64xf32>,
    %c0_i32_55 = arith.constant 0 : i32
    %123 = arith.cmpi eq, %arg0, %c0_i32_55 : i32
    %124 = arith.extui %123 : i1 to i32
    %c0_i32_56 = arith.constant 0 : i32
    %125 = arith.cmpi ne, %124, %c0_i32_56 : i32
    scf.if %125 {
      %c0_57 = arith.constant 0 : index
      %c0_58 = arith.constant 0 : index
      %126 = vector.load %arg10[%c0_57, %c0_58] : memref<8x128xf32, #tpu.memory_space<vmem>>, vector<8x128xf32>
      %c0_59 = arith.constant 0 : index
      %c0_60 = arith.constant 0 : index
      %127 = vector.load %arg9[%c0_59, %c0_60] : memref<8x128xf32, #tpu.memory_space<vmem>>, vector<8x128xf32>
      tpu.vector_store %arg9[%c0_59, %c0_60], %126 {strides = array<i32>} : memref<8x128xf32, #tpu.memory_space<vmem>>, vector<8x128xf32>,
    } else {
    }
    return
  }
  func.func @transform_0(%arg0: i32, %arg1: memref<8xi32, #tpu.memory_space<smem>>) -> (i32, i32) {
    %c0_i32 = arith.constant 0 : i32
    %c0_i32_0 = arith.constant 0 : i32
    %c0_i32_1 = arith.constant 0 : i32
    return %c0_i32, %c0_i32_0 : i32, i32
  }
  func.func @transform_1(%arg0: i32, %arg1: memref<8xi32, #tpu.memory_space<smem>>) -> (i32, i32) {
    %c0_i32 = arith.constant 0 : i32
    %c0_i32_0 = arith.constant 0 : i32
    %c0_i32_1 = arith.constant 0 : i32
    return %c0_i32, %c0_i32_0 : i32, i32
  }
  func.func @transform_2(%arg0: i32, %arg1: memref<8xi32, #tpu.memory_space<smem>>) -> (i32, i32, i32) {
    %c0_i32 = arith.constant 0 : i32
    %c0_i32_0 = arith.constant 0 : i32
    %c0_i32_1 = arith.constant 0 : i32
    %c0_i32_2 = arith.constant 0 : i32
    return %c0_i32, %c0_i32_0, %c0_i32_1 : i32, i32, i32
  }
  func.func @transform_3(%arg0: i32, %arg1: memref<8xi32, #tpu.memory_space<smem>>) -> (i32, i32, i32) {
    %c0_i32 = arith.constant 0 : i32
    %c0_i32_0 = arith.constant 0 : i32
    %c0_i32_1 = arith.constant 0 : i32
    %c0_i32_2 = arith.constant 0 : i32
    return %c0_i32, %c0_i32_0, %c0_i32_1 : i32, i32, i32
  }
  func.func @transform_4(%arg0: i32, %arg1: memref<8xi32, #tpu.memory_space<smem>>) -> (i32, i32) {
    %c0_i32 = arith.constant 0 : i32
    %c0_i32_0 = arith.constant 0 : i32
    %c0_i32_1 = arith.constant 0 : i32
    return %c0_i32, %c0_i32_0 : i32, i32
  }
  func.func @transform_5(%arg0: i32, %arg1: memref<8xi32, #tpu.memory_space<smem>>) -> (i32, i32) {
    %c0_i32 = arith.constant 0 : i32
    %c0_i32_0 = arith.constant 0 : i32
    %c0_i32_1 = arith.constant 0 : i32
    return %c0_i32, %c0_i32_0 : i32, i32
  }
  func.func @transform_6(%arg0: i32, %arg1: memref<8xi32, #tpu.memory_space<smem>>) -> (i32, i32, i32) {
    %c0_i32 = arith.constant 0 : i32
    %c0_i32_0 = arith.constant 0 : i32
    %c0_i32_1 = arith.constant 0 : i32
    return %arg0, %c0_i32, %c0_i32_0 : i32, i32, i32
  }
  func.func @transform_7(%arg0: i32, %arg1: memref<8xi32, #tpu.memory_space<smem>>) -> (i32, i32) {
    %c0_i32 = arith.constant 0 : i32
    %c0_i32_0 = arith.constant 0 : i32
    %c0_i32_1 = arith.constant 0 : i32
    return %c0_i32, %c0_i32_0 : i32, i32
  }
}

</mosaic_0001>

<llo_original>
// kernel: decoder_decode_steps.1
$region0: #{decoder_decode_steps.1}
  #allocation0 [shape = 'u32[]', space=smem, size = 0x4, offset = 0x4, fixed_abs, tag = 'smem constant byte address 0x4 - core index']
  #allocation1 [shape = 'u32[144,128]{1,0:T(1,128)}', space=vmem, size = 0x12000, scoped, tag = 'internal scratch']
  #allocation2 [shape = 'f32[8,128]{1,0:T(8,128)}', space=vmem, size = 0x1000, scoped, tag = 'scratch operand']
  #allocation3 [shape = 's32[1]{0}', space=sflag, size = 0x4, scoped, tag = 'scoped memory for decoder_decode_steps.1']
  #allocation4 [shape = 'u8[512]{0}', space=smem, size = 0x200, scoped, tag = 'prefetched SMEM operand 0']
  %s0 = inlined_call_operand.vmem [shape: s32[8], index: 0, kind: input, shape index: {}]
  %s1 = inlined_call_operand.vmem [shape: f32[8,128], index: 1, kind: input, shape index: {}]
  %s2 = inlined_call_operand.vmem [shape: f32[64,32], index: 2, kind: input, shape index: {}]
  %s3 = inlined_call_operand.vmem [shape: bf16[2,64,128], index: 3, kind: input, shape index: {}]
  %s4 = inlined_call_operand.vmem [shape: f32[2,1,128], index: 4, kind: input, shape index: {}]
  %s5 = inlined_call_operand.vmem [shape: bf16[32,64], index: 5, kind: input, shape index: {}]
  %s6 = inlined_call_operand.vmem [shape: f32[1,64], index: 6, kind: input, shape index: {}]
  %s7 = inlined_call_operand.hbm [shape: f32[1,8,64], index: 7, kind: output, shape index: {0}]
  %s8 = inlined_call_operand.vmem [shape: f32[8,128], index: 8, kind: output, shape index: {1}]
  %9 = xla_tuple %s7, %s8
  %s10 = sld [smem:[#allocation0]]
  $region50: #{decoder_decode_steps.1} parent=0
    _
  %s12 = ssub.s32 1, %s10
  %s13 = scalar_select 0, %s12, %s10
  %s14 = sshll.u32 %s0, 4
  %s15 = int_to_ptr.vmem [resolvable:$true] %s14
  %17 = dma.vmem_to_smem %s15, 16, [#allocation4], [#allocation3]
  %18 = dma.done [#allocation3], 16
  %19 = sfence
  $region1: #{decoder_decode_steps.1} parent=0
    #allocation5 [shape = 'u8[4096]{0}', space=vmem, size = 0x1000, scoped, tag = 'output window, operand 0, single buffered']
    #allocation6 [shape = 's32[1]{0}', space=sflag, size = 0x4, scoped, tag = 'scoped memory for decoder_decode_steps.1']
    %20 = vsyncpa [#allocation6], 0
    // Predicated region
    $region2: #{decoder_decode_steps.1} parent=1 // pred_check
      _
    $region3: #{decoder_decode_steps.1} parent=1 // pred_check_branch
      %22 = sbr.rel (0) target = $region5
    $region4: #{decoder_decode_steps.1} parent=1 // pred_region
      _
    $region5: #{decoder_decode_steps.1} parent=1 // pred_fallthru
      _
    // Predicated region
    $region6: #{decoder_decode_steps.1} parent=1 // pred_check
      _
    $region7: #{decoder_decode_steps.1} parent=1 // pred_check_branch
      %24 = sbr.rel (0) target = $region9
    $region8: #{decoder_decode_steps.1} parent=1 // pred_region
      _
    $region9: #{decoder_decode_steps.1} parent=1 // pred_fallthru
      _
    // Predicated region
    $region10: #{decoder_decode_steps.1} parent=1 // pred_check
      _
    $region11: #{decoder_decode_steps.1} parent=1 // pred_check_branch
      %26 = sbr.rel (0) target = $region13
    $region12: #{decoder_decode_steps.1} parent=1 // pred_region
      _
    $region13: #{decoder_decode_steps.1} parent=1 // pred_fallthru
      _
    // Predicated region
    $region14: #{decoder_decode_steps.1} parent=1 // pred_check
      _
    $region15: #{decoder_decode_steps.1} parent=1 // pred_check_branch
      %28 = sbr.rel (0) target = $region17
    $region16: #{decoder_decode_steps.1} parent=1 // pred_region
      _
    $region17: #{decoder_decode_steps.1} parent=1 // pred_fallthru
      _
    // Predicated region
    $region18: #{decoder_decode_steps.1} parent=1 // pred_check
      _
    $region19: #{decoder_decode_steps.1} parent=1 // pred_check_branch
      %30 = sbr.rel (0) target = $region21
    $region20: #{decoder_decode_steps.1} parent=1 // pred_region
      _
    $region21: #{decoder_decode_steps.1} parent=1 // pred_fallthru
      _
    // Predicated region
    $region22: #{decoder_decode_steps.1} parent=1 // pred_check
      _
    $region23: #{decoder_decode_steps.1} parent=1 // pred_check_branch
      %32 = sbr.rel (0) target = $region25
    $region24: #{decoder_decode_steps.1} parent=1 // pred_region
      _
    $region25: #{decoder_decode_steps.1} parent=1 // pred_fallthru
      _
    %p34 = scmp.eq.s32.totalorder 0, 0
    // Predicated region
    $region26: #{decoder_decode_steps.1} parent=1 // pred_check
      %p35 = pneg %p34
    $region27: #{decoder_decode_steps.1} parent=1 // pred_check_branch
      %37 = sbr.rel (%p35) target = $region29
    $region28: #{decoder_decode_steps.1} parent=1 // pred_region
      %v38 = vld [vmem:[%s1] sm:$0xff]
      %39 = vst [vmem:[#allocation2] sm:$0xff] %v38
    $region29: #{decoder_decode_steps.1} parent=1 // pred_fallthru
      _
    %s40 = smul.u32 0, 8
    %s41 = sld [smem:[#allocation4 + %s40]]
    %s42 = scalar_lea.vmem %s2, %s41
    %v43 = vld [vmem:[%s42] sm:$0x1]
    %s44 = sadd.s32 %s40, 1
    %s45 = sld [smem:[#allocation4 + %s44]]
    %s46 = scalar_lea.vmem %s2, %s45
    %v47 = vld [vmem:[%s46] sm:$0x1]
    %s48 = sadd.s32 %s40, 2
    %s49 = sld [smem:[#allocation4 + %s48]]
    %s50 = scalar_lea.vmem %s2, %s49
    %v51 = vld [vmem:[%s50] sm:$0x1]
    %s52 = sadd.s32 %s40, 3
    %s53 = sld [smem:[#allocation4 + %s52]]
    %s54 = scalar_lea.vmem %s2, %s53
    %v55 = vld [vmem:[%s54] sm:$0x1]
    %s56 = sadd.s32 %s40, 4
    %s57 = sld [smem:[#allocation4 + %s56]]
    %s58 = scalar_lea.vmem %s2, %s57
    %v59 = vld [vmem:[%s58] sm:$0x1]
    %s60 = sadd.s32 %s40, 5
    %s61 = sld [smem:[#allocation4 + %s60]]
    %s62 = scalar_lea.vmem %s2, %s61
    %v63 = vld [vmem:[%s62] sm:$0x1]
    %s64 = sadd.s32 %s40, 6
    %s65 = sld [smem:[#allocation4 + %s64]]
    %s66 = scalar_lea.vmem %s2, %s65
    %v67 = vld [vmem:[%s66] sm:$0x1]
    %s68 = sadd.s32 %s40, 7
    %s69 = sld [smem:[#allocation4 + %s68]]
    %s70 = scalar_lea.vmem %s2, %s69
    %v71 = vld [vmem:[%s70] sm:$0x1]
    %v73 = vrot.slane %v47, 7
    %v76 = vrot.slane %v51, 6
    %v79 = vrot.slane %v55, 5
    %v82 = vrot.slane %v59, 4
    %v85 = vrot.slane %v63, 3
    %v88 = vrot.slane %v67, 2
    %v91 = vrot.slane %v71, 1
    %vm93 = vcmask 1040384
    %v94 = vsel %vm93, %v43, %v73
    %vm95 = vcmask 1041408
    %v96 = vsel %vm95, %v94, %v76
    %vm97 = vcmask 1042432
    %v98 = vsel %vm97, %v96, %v79
    %vm99 = vcmask 1043456
    %v100 = vsel %vm99, %v98, %v82
    %vm101 = vcmask 1044480
    %v102 = vsel %vm101, %v100, %v85
    %vm103 = vcmask 1045504
    %v104 = vsel %vm103, %v102, %v88
    %vm105 = vcmask 1046528
    %v106 = vsel %vm105, %v104, %v91
    %v107 = vld [vmem:[#allocation2] sm:$0xff]
    %109 = vrot.lane.b32.xlu0 %v107, 32
    %v110 = vpop.permute.xlu0 %109
    %vm112 = vcmask 261120
    %v113 = vsel %vm112, %v106, %v110
    %v114 = vpack.c.bf16 %v113, %v113
    %v115 = vld [vmem:[%s3] sm:$0xf]
    %v116 = vld [vmem:[%s3 + $0x4] sm:$0xf]
    %v117 = vld [vmem:[%s3 + $0x8] sm:$0xf]
    %v118 = vld [vmem:[%s3 + $0xc] sm:$0xf]
    %v119 = vld [vmem:[%s3 + $0x10] sm:$0xf]
    %v120 = vld [vmem:[%s3 + $0x14] sm:$0xf]
    %v121 = vld [vmem:[%s3 + $0x18] sm:$0xf]
    %v122 = vld [vmem:[%s3 + $0x1c] sm:$0xf]
    %v123 = vld [vmem:[%s4] sm:$0x1]
    %v125 = vlaneseq
    %v126 = vshrl.u32 %v125, 7
    %v127 = vsub.s32 0, %v126
    %v128 = vrot.slane %v123, %v127
    %v138 = vunpack.c.l.b16 %v115
    %v139 = vunpack.c.l.b16 %v116
    %v140 = vunpack.c.l.b16 %v117
    %v141 = vunpack.c.l.b16 %v118
    %v142 = vunpack.c.l.b16 %v119
    %v143 = vunpack.c.l.b16 %v120
    %v144 = vunpack.c.l.b16 %v121
    %v145 = vunpack.c.l.b16 %v122
    %v146 = vpack.c.b16 %v139, %v138
    %v147 = vpack.c.b16 %v141, %v140
    %v148 = vpack.c.b16 %v143, %v142
    %v149 = vpack.c.b16 %v145, %v144
    %vm154 = vcmask 523264
    %v156 = vsel %vm154, %v114, 0
    %158 = vmatprep.subr.bf16.mxu0 0
    %159 = vmatpush1.bf16.msra.mxu0 0
    %160 = vmatprep.subr.bf16.mxu0 0
    %161 = vmatpush1.bf16.msra.mxu0 0
    %162 = vmatprep.subr.bf16.mxu0 0
    %163 = vmatpush1.bf16.msra.mxu0 0
    %164 = vmatprep.subr.bf16.mxu0 0
    %165 = vmatpush1.bf16.msra.mxu0 0
    %166 = vmatprep.subr.bf16.mxu0 0
    %167 = vmatpush1.bf16.msra.mxu0 %v149
    %168 = vmatprep.subr.bf16.mxu0 0
    %169 = vmatpush1.bf16.msra.mxu0 %v148
    %170 = vmatprep.subr.bf16.mxu0 0
    %171 = vmatpush1.bf16.msra.mxu0 %v147
    %172 = vmatprep.subr.bf16.mxu0 0
    %173 = vmatpush1.bf16.msra.mxu0 %v146
    %174 = vmatprep.subr.bf16.mxu0 0
    %175 = vmatpush2.bf16.msra.mxu0 0
    %176 = vmatprep.subr.bf16.mxu0 0
    %177 = vmatpush2.bf16.msra.mxu0 0
    %178 = vmatprep.subr.bf16.mxu0 0
    %179 = vmatpush2.bf16.msra.mxu0 0
    %180 = vmatprep.subr.bf16.mxu0 0
    %181 = vmatpush2.bf16.msra.mxu0 0
    %182 = vmatprep.subr.bf16.mxu0 0
    %183 = vmatpush2.bf16.msra.mxu0 0
    %184 = vmatprep.subr.bf16.mxu0 0
    %185 = vmatpush2.bf16.msra.mxu0 0
    %186 = vmatprep.subr.bf16.mxu0 0
    %187 = vmatpush2.bf16.msra.mxu0 0
    %188 = vmatprep.subr.bf16.mxu0 0
    %189 = vmatpush2.bf16.msra.mxu0 0
    %190 = vmatprep.mubr.bf16.mxu0 0
    %191 = vmatmul.mubr.bf16.gmra.mxu0 %v156
    %v192 = vpop.f32.mrf.mxu0
    %v193 = vadd.f32 %v128, %v192
    %v194 = vpop.f32.mrf.mxu0
    %v195 = vpop.f32.mrf.mxu0
    %v196 = vpop.f32.mrf.mxu0
    %197 = vdwg.mxu0
    %v198 = vxor.u32 %v193, 2147483648
    %v199 = vmul.f32 %v198, 1.442695
    %v200 = vpow.pop %v199
    %v201 = vadd.f32 %v200, 1.0
    %v202 = vrcp.pop %v201
    %v203 = vmul.f32 1.0, %v202
    %v204 = vmul.f32 %v203, 2.0
    %v205 = vsub.f32 %v204, 1.0
    %206 = vrot.lane.b32.xlu0 %v107, 96
    %v207 = vpop.permute.xlu0 %206
    %v209 = vmul.f32 %v203, %v207
    %211 = vrot.lane.b32.xlu0 %v205, 64
    %v212 = vpop.permute.xlu0 %211
    %v214 = vmul.f32 %v203, %v212
    %216 = vrot.lane.b32.xlu0 %v214, 32
    %v217 = vpop.permute.xlu0 %216
    %v219 = vadd.f32 %v209, %v217
    %v220 = vtanh.pop %v219
    %222 = vrot.lane.b32.xlu0 %v220, 64
    %v223 = vpop.permute.xlu0 %222
    %v225 = vmul.f32 %v203, %v223
    %227 = vrot.lane.b32.xlu0 %v225, 32
    %v228 = vpop.permute.xlu0 %227
    %230 = vst.msk [vmem:[#allocation2] sm:$0xff] %vm112, %v228
    %232 = vrot.lane.b32.xlu0 %v219, 32
    %v233 = vpop.permute.xlu0 %232
    %vm235 = vcmask 785920
    %236 = vst.msk [vmem:[#allocation2] sm:$0xff] %vm235, %v233
    %v237 = vld [vmem:[#allocation2] sm:$0xff]
    %v238 = vsel %vm112, %v228, %v237
    %v239 = vpack.c.bf16 %v238, %v238
    %s240 = scalar_lea.vmem %s3, 32
    %v241 = vld [vmem:[%s240] sm:$0xf]
    %v242 = vld [vmem:[%s240 + $0x4] sm:$0xf]
    %v243 = vld [vmem:[%s240 + $0x8] sm:$0xf]
    %v244 = vld [vmem:[%s240 + $0xc] sm:$0xf]
    %v245 = vld [vmem:[%s240 + $0x10] sm:$0xf]
    %v246 = vld [vmem:[%s240 + $0x14] sm:$0xf]
    %v247 = vld [vmem:[%s240 + $0x18] sm:$0xf]
    %v248 = vld [vmem:[%s240 + $0x1c] sm:$0xf]
    %s249 = scalar_lea.vmem %s4, 1
    %v250 = vld [vmem:[%s249] sm:$0x1]
    %v252 = vlaneseq
    %v253 = vshrl.u32 %v252, 7
    %v254 = vsub.s32 0, %v253
    %v255 = vrot.slane %v250, %v254
    %v265 = vunpack.c.l.b16 %v241
    %v266 = vunpack.c.l.b16 %v242
    %v267 = vunpack.c.l.b16 %v243
    %v268 = vunpack.c.l.b16 %v244
    %v269 = vunpack.c.l.b16 %v245
    %v270 = vunpack.c.l.b16 %v246
    %v271 = vunpack.c.l.b16 %v247
    %v272 = vunpack.c.l.b16 %v248
    %v273 = vpack.c.b16 %v266, %v265
    %v274 = vpack.c.b16 %v268, %v267
    %v275 = vpack.c.b16 %v270, %v269
    %v276 = vpack.c.b16 %v272, %v271
    %v282 = vsel %vm154, %v239, 0
    %284 = vmatprep.subr.bf16.mxu0 0
    %285 = vmatpush1.bf16.msra.mxu0 0
    %286 = vmatprep.subr.bf16.mxu0 0
    %287 = vmatpush1.bf16.msra.mxu0 0
    %288 = vmatprep.subr.bf16.mxu0 0
    %289 = vmatpush1.bf16.msra.mxu0 0
    %290 = vmatprep.subr.bf16.mxu0 0
    %291 = vmatpush1.bf16.msra.mxu0 0
    %292 = vmatprep.subr.bf16.mxu0 0
    %293 = vmatpush1.bf16.msra.mxu0 %v276
    %294 = vmatprep.subr.bf16.mxu0 0
    %295 = vmatpush1.bf16.msra.mxu0 %v275
    %296 = vmatprep.subr.bf16.mxu0 0
    %297 = vmatpush1.bf16.msra.mxu0 %v274
    %298 = vmatprep.subr.bf16.mxu0 0
    %299 = vmatpush1.bf16.msra.mxu0 %v273
    %300 = vmatprep.subr.bf16.mxu0 0
    %301 = vmatpush2.bf16.msra.mxu0 0
    %302 = vmatprep.subr.bf16.mxu0 0
    %303 = vmatpush2.bf16.msra.mxu0 0
    %304 = vmatprep.subr.bf16.mxu0 0
    %305 = vmatpush2.bf16.msra.mxu0 0
    %306 = vmatprep.subr.bf16.mxu0 0
    %307 = vmatpush2.bf16.msra.mxu0 0
    %308 = vmatprep.subr.bf16.mxu0 0
    %309 = vmatpush2.bf16.msra.mxu0 0
    %310 = vmatprep.subr.bf16.mxu0 0
    %311 = vmatpush2.bf16.msra.mxu0 0
    %312 = vmatprep.subr.bf16.mxu0 0
    %313 = vmatpush2.bf16.msra.mxu0 0
    %314 = vmatprep.subr.bf16.mxu0 0
    %315 = vmatpush2.bf16.msra.mxu0 0
    %316 = vmatprep.mubr.bf16.mxu0 0
    %317 = vmatmul.mubr.bf16.gmra.mxu0 %v282
    %v318 = vpop.f32.mrf.mxu0
    %v319 = vadd.f32 %v255, %v318
    %v320 = vpop.f32.mrf.mxu0
    %v321 = vpop.f32.mrf.mxu0
    %v322 = vpop.f32.mrf.mxu0
    %323 = vdwg.mxu0
    %v324 = vxor.u32 %v319, 2147483648
    %v325 = vmul.f32 %v324, 1.442695
    %v326 = vpow.pop %v325
    %v327 = vadd.f32 %v326, 1.0
    %v328 = vrcp.pop %v327
    %v329 = vmul.f32 1.0, %v328
    %v330 = vmul.f32 %v329, 2.0
    %v331 = vsub.f32 %v330, 1.0
    %333 = vrot.lane.b32.xlu0 %v237, 64
    %v334 = vpop.permute.xlu0 %333
    %v336 = vmul.f32 %v329, %v334
    %338 = vrot.lane.b32.xlu0 %v331, 64
    %v339 = vpop.permute.xlu0 %338
    %v341 = vmul.f32 %v329, %v339
    %343 = vrot.lane.b32.xlu0 %v341, 32
    %v344 = vpop.permute.xlu0 %343
    %v346 = vadd.f32 %v336, %v344
    %v347 = vtanh.pop %v346
    %349 = vrot.lane.b32.xlu0 %v347, 64
    %v350 = vpop.permute.xlu0 %349
    %v352 = vmul.f32 %v329, %v350
    %354 = vrot.lane.b32.xlu0 %v352, 64
    %v355 = vpop.permute.xlu0 %354
    %vm357 = vcmask 523520
    %358 = vst.msk [vmem:[#allocation2] sm:$0xff] %vm357, %v355
    %360 = vrot.lane.b32.xlu0 %v346, 64
    %v361 = vpop.permute.xlu0 %360
    %vm363 = vcmask 1048320
    %364 = vst.msk [vmem:[#allocation2] sm:$0xff] %vm363, %v361
    %v365 = vpack.c.bf16 %v352, %v352
    %v366 = vld [vmem:[%s5] sm:$0xf]
    %v367 = vld [vmem:[%s5 + $0x4] sm:$0xf]
    %v368 = vld [vmem:[%s5 + $0x8] sm:$0xf]
    %v369 = vld [vmem:[%s5 + $0xc] sm:$0xf]
    %v370 = vld [vmem:[%s6] sm:$0x1]
    %v372 = vlaneseq
    %v373 = vshrl.u32 %v372, 7
    %v374 = vsub.s32 0, %v373
    %v375 = vrot.slane %v370, %v374
    %378 = vrot.lane.b32.xlu0 %v365, 32
    %v379 = vpop.permute.xlu0 %378
    %v384 = vunpack.c.l.b16 %v366
    %v385 = vunpack.c.l.b16 %v367
    %v386 = vunpack.c.l.b16 %v368
    %v387 = vunpack.c.l.b16 %v369
    %v388 = vpack.c.b16 %v385, %v384
    %v389 = vpack.c.b16 %v387, %v386
    %v393 = vsel %vm112, %v379, 0
    %395 = vmatprep.subr.bf16.mxu0 0
    %396 = vmatpush1.bf16.msra.mxu0 0
    %397 = vmatprep.subr.bf16.mxu0 0
    %398 = vmatpush1.bf16.msra.mxu0 0
    %399 = vmatprep.subr.bf16.mxu0 0
    %400 = vmatpush1.bf16.msra.mxu0 0
    %401 = vmatprep.subr.bf16.mxu0 0
    %402 = vmatpush1.bf16.msra.mxu0 0
    %403 = vmatprep.subr.bf16.mxu0 0
    %404 = vmatpush1.bf16.msra.mxu0 0
    %405 = vmatprep.subr.bf16.mxu0 0
    %406 = vmatpush1.bf16.msra.mxu0 0
    %407 = vmatprep.subr.bf16.mxu0 0
    %408 = vmatpush1.bf16.msra.mxu0 %v389
    %409 = vmatprep.subr.bf16.mxu0 0
    %410 = vmatpush1.bf16.msra.mxu0 %v388
    %411 = vmatprep.subr.bf16.mxu0 0
    %412 = vmatpush2.bf16.msra.mxu0 0
    %413 = vmatprep.subr.bf16.mxu0 0
    %414 = vmatpush2.bf16.msra.mxu0 0
    %415 = vmatprep.subr.bf16.mxu0 0
    %416 = vmatpush2.bf16.msra.mxu0 0
    %417 = vmatprep.subr.bf16.mxu0 0
    %418 = vmatpush2.bf16.msra.mxu0 0
    %419 = vmatprep.subr.bf16.mxu0 0
    %420 = vmatpush2.bf16.msra.mxu0 0
    %421 = vmatprep.subr.bf16.mxu0 0
    %422 = vmatpush2.bf16.msra.mxu0 0
    %423 = vmatprep.subr.bf16.mxu0 0
    %424 = vmatpush2.bf16.msra.mxu0 0
    %425 = vmatprep.subr.bf16.mxu0 0
    %426 = vmatpush2.bf16.msra.mxu0 0
    %427 = vmatprep.mubr.bf16.mxu0 0
    %428 = vmatmul.mubr.bf16.gmra.mxu0 %v393
    %v429 = vpop.f32.mrf.mxu0
    %v430 = vadd.f32 %v375, %v429
    %v431 = vpop.f32.mrf.mxu0
    %v432 = vpop.f32.mrf.mxu0
    %v433 = vpop.f32.mrf.mxu0
    %434 = vdwg.mxu0
    %435 = vst.msk [vmem:[#allocation5] sm:$0xff] %vm154, %v430
    // Predicated region
    $region30: #{decoder_decode_steps.1} parent=1 // pred_check
      %p436 = pneg %p34
    $region31: #{decoder_decode_steps.1} parent=1 // pred_check_branch
      %438 = sbr.rel (%p436) target = $region33
    $region32: #{decoder_decode_steps.1} parent=1 // pred_region
      %v439 = vld [vmem:[#allocation2] sm:$0xff]
      %440 = vst [vmem:[%s8] sm:$0xff] %v439
    $region33: #{decoder_decode_steps.1} parent=1 // pred_fallthru
      _
    // Predicated region
    $region34: #{decoder_decode_steps.1} parent=1 // pred_check
      _
    $region35: #{decoder_decode_steps.1} parent=1 // pred_check_branch
      %442 = sbr.rel (0) target = $region37
    $region36: #{decoder_decode_steps.1} parent=1 // pred_region
      %s444 = ssub.s32 128, 128
      %445 = vsyncadd [#allocation6], %s444
      %s447 = sshll.u32 [#allocation5], 4
      %s448 = int_to_ptr.vmem [resolvable:$true] %s447
      %450 = dma.vmem_to_hbm [thread:$0]  %s448, 128, %s7, [#allocation6]
    $region37: #{decoder_decode_steps.1} parent=1 // pred_fallthru
      _
    // Predicated region
    $region38: #{decoder_decode_steps.1} parent=1 // pred_check
      _
    $region39: #{decoder_decode_steps.1} parent=1 // pred_check_branch
      %452 = sbr.rel (0) target = $region41
    $region40: #{decoder_decode_steps.1} parent=1 // pred_region
      _
    $region41: #{decoder_decode_steps.1} parent=1 // pred_fallthru
      _
    // Predicated region
    $region42: #{decoder_decode_steps.1} parent=1 // pred_check
      _
    $region43: #{decoder_decode_steps.1} parent=1 // pred_check_branch
      %454 = sbr.rel (0) target = $region45
    $region44: #{decoder_decode_steps.1} parent=1 // pred_region
      %455 = dma.done [#allocation6], 128
    $region45: #{decoder_decode_steps.1} parent=1 // pred_fallthru
      _
    // Predicated region
    $region46: #{decoder_decode_steps.1} parent=1 // pred_check
      _
    $region47: #{decoder_decode_steps.1} parent=1 // pred_check_branch
      %457 = sbr.rel (0) target = $region49
    $region48: #{decoder_decode_steps.1} parent=1 // pred_region
      _
    $region49: #{decoder_decode_steps.1} parent=1 // pred_fallthru
      _
    %458 = vsyncpa [#allocation6], 1

</llo_original>
